<compile_context>
chip_gen: v7x
topology: tpu7x:2x2x1
jax: 0.10.0
libtpu: 0.0.40
codegen_flags: <defaults>
</compile_context>

<pallas_src>
import functools
import math

import jax
import jax.numpy as jnp
from jax import lax
from jax.experimental import pallas as pl
from jax.experimental.pallas import tpu as pltpu


# ---------------------------------------------------------------------------
# Generation-aware knobs (lazy + cached, with safe fallbacks)
# ---------------------------------------------------------------------------
@functools.lru_cache(maxsize=None)
def _device_kind() -> str:
    try:
        return jax.devices()[0].device_kind.lower()
    except Exception:
        return ""


@functools.lru_cache(maxsize=None)
def _vmem_limit_bytes() -> int:
    # ~55% of physical VMEM: 128 MiB (v5e/v6e) -> ~70 MiB, 64 MiB (v7x) -> ~35 MiB.
    try:
        cap = pltpu.get_tpu_info().vmem_capacity_bytes
        return max(32 << 20, min(96 << 20, int(cap * 0.55)))
    except Exception:
        return 48 << 20  # known-safe on every generation


def _is_v5() -> bool:
    return "v5" in _device_kind()


def _use_bf16_exp() -> bool:
    # v6e/v7x have a bf16 EUP path (~2x exp throughput); v5e does not.
    dk = _device_kind()
    return any(t in dk for t in ("v6", "v7", "tpu7"))


def _pick_tile(dim, preferred, align):
    """Largest tile <= preferred that divides dim (falls back to the full dim)."""
    if dim <= preferred:
        return dim
    t = preferred
    while t >= align:
        if dim % t == 0:
            return t
        t //= 2
    return dim


# ---------------------------------------------------------------------------
# Tiled linear: y = x @ W^T + b   (nn.Linear stores W as (out_features, in_features)).
# W arrives as bf16 (cast once at prep time), bias as f32, f32 MXU accumulation.
# ---------------------------------------------------------------------------
def _linear_kernel(x_ref, w_ref, b_ref, o_ref, acc_ref):
    kk = pl.program_id(2)

    @pl.when(kk == 0)
    def _():
        acc_ref[...] = jnp.zeros_like(acc_ref)

    # Weights are already bf16; activation cast is a no-op when x is already bf16.
    x = x_ref[...].astype(jnp.bfloat16)
    w = w_ref[...]
    acc_ref[...] += lax.dot_general(
        x, w, (((1,), (1,)), ((), ())), preferred_element_type=jnp.float32)

    @pl.when(kk == pl.num_programs(2) - 1)
    def _():
        o_ref[...] = (acc_ref[...] + b_ref[...]).astype(o_ref.dtype)


def linear(x2d, w_bf16, b_f32, *, out_dtype, tm_pref=256, tk_pref=512):
    M, Din = x2d.shape
    Dout, Din2 = w_bf16.shape
    assert Din == Din2
    tm = _pick_tile(M, tm_pref, 8)
    tk = _pick_tile(Din, tk_pref, 128)
    # Keep the whole output dim resident when the (Dout, tk) bf16 weight tile is small
    # (double-buffered): every activation tile is then DMA'd exactly once.
    if Dout * tk * 2 * 2 <= (8 << 20):
        tn = Dout
    else:
        tn = _pick_tile(Dout, 256, 128)
    grid = (M // tm, Dout // tn, Din // tk)
    return pl.pallas_call(
        _linear_kernel,
        out_shape=jax.ShapeDtypeStruct((M, Dout), out_dtype),
        grid_spec=pltpu.PrefetchScalarGridSpec(
            num_scalar_prefetch=0,
            grid=grid,
            in_specs=[
                pl.BlockSpec((tm, tk), lambda i, j, kk: (i, kk)),
                pl.BlockSpec((tn, tk), lambda i, j, kk: (j, kk)),
                pl.BlockSpec((1, tn), lambda i, j, kk: (0, j)),
            ],
            out_specs=pl.BlockSpec((tm, tn), lambda i, j, kk: (i, j)),
            scratch_shapes=[pltpu.VMEM((tm, tn), jnp.float32)],
        ),
        compiler_params=pltpu.CompilerParams(
            dimension_semantics=("parallel", "parallel", "arbitrary"),
            vmem_limit_bytes=_vmem_limit_bytes(),
        ),
    )(x2d, w_bf16, b_f32.reshape(1, Dout))


# ---------------------------------------------------------------------------
# Flash-style attention. Q/K/V tiles are sliced directly out of the bf16 projection
# output (B*S, D) -- or the fused (B*S, 3D) -- via the index_maps (head split is
# pure layout plumbing). Context is written back bf16 in (B, S, H*d_k) order.
# Q arrives pre-scaled by 1/sqrt(d_k) (folded into w_q/b_q at prep time).
# ---------------------------------------------------------------------------
def _flash_attn_kernel(q_ref, k_ref, v_ref, o_ref, m_ref, l_ref, acc_ref,
                       *, bf16_exp):
    ki = pl.program_id(2)

    @pl.when(ki == 0)
    def _():
        m_ref[...] = jnp.full_like(m_ref, -jnp.inf)
        l_ref[...] = jnp.zeros_like(l_ref)
        acc_ref[...] = jnp.zeros_like(acc_ref)

    s = lax.dot_general(
        q_ref[...], k_ref[...], (((1,), (1,)), ((), ())),
        preferred_element_type=jnp.float32)

    # NOTE: mask intentionally not applied (reference uses non in-place masked_fill).
    m_prev = m_ref[...]
    m_new = jnp.maximum(m_prev, jnp.max(s, axis=-1, keepdims=True))
    alpha = jnp.exp(m_prev - m_new)
    if bf16_exp:
        # v6e/v7x: bf16 EUP exp (~2x throughput); row-sum accumulated in f32.
        p = jnp.exp((s - m_new).astype(jnp.bfloat16))
        row_sum = jnp.sum(p, axis=-1, keepdims=True, dtype=jnp.float32)
    else:
        p_f32 = jnp.exp(s - m_new)
        row_sum = jnp.sum(p_f32, axis=-1, keepdims=True)
        p = p_f32.astype(jnp.bfloat16)
    l_ref[...] = alpha * l_ref[...] + row_sum
    acc_ref[...] = alpha * acc_ref[...] + jnp.dot(
        p, v_ref[...], preferred_element_type=jnp.float32)
    m_ref[...] = m_new

    @pl.when(ki == pl.num_programs(2) - 1)
    def _():
        o_ref[...] = (acc_ref[...] *
                      pl.reciprocal(l_ref[...], approx=True)).astype(o_ref.dtype)


def flash_attention(q_arr, k_arr, v_arr, col_base, B, S, H, d_k, out_dtype,
                    *, tq_pref=None, tkv_pref=None):
    # v5e: single vector-store slot + no bf16 VPU -> smaller flash tiles there.
    tq_default, tkv_default = (128, 256) if _is_v5() else (256, 512)
    tq = _pick_tile(S, tq_pref or tq_default, 128)
    tkv = _pick_tile(S, tkv_pref or tkv_default, 128)
    nq = S // tq
    nkv = S // tkv
    qb, kb, vb = col_base  # column block offsets (units of d_k) of Q/K/V sections

    def q_map(bh, qi, ki):
        return ((bh // H) * nq + qi, qb + bh % H)

    def k_map(bh, qi, ki):
        return ((bh // H) * nkv + ki, kb + bh % H)

    def v_map(bh, qi, ki):
        return ((bh // H) * nkv + ki, vb + bh % H)

    def o_map(bh, qi, ki):
        return ((bh // H) * nq + qi, bh % H)

    kernel = functools.partial(_flash_attn_kernel, bf16_exp=_use_bf16_exp())
    return pl.pallas_call(
        kernel,
        out_shape=jax.ShapeDtypeStruct((B * S, H * d_k), out_dtype),
        grid_spec=pltpu.PrefetchScalarGridSpec(
            num_scalar_prefetch=0,
            grid=(B * H, nq, nkv),
            in_specs=[
                pl.BlockSpec((tq, d_k), q_map),
                pl.BlockSpec((tkv, d_k), k_map),
                pl.BlockSpec((tkv, d_k), v_map),
            ],
            out_specs=pl.BlockSpec((tq, d_k), o_map),
            scratch_shapes=[
                pltpu.VMEM((tq, 1), jnp.float32),    # running max
                pltpu.VMEM((tq, 1), jnp.float32),    # running sum
                pltpu.VMEM((tq, d_k), jnp.float32),  # output accumulator
            ],
        ),
        compiler_params=pltpu.CompilerParams(
            dimension_semantics=("parallel", "parallel", "arbitrary"),
            vmem_limit_bytes=_vmem_limit_bytes(),
        ),
    )(q_arr, k_arr, v_arr)


# ---------------------------------------------------------------------------
# Optional: explicit (B, H, S, S) post-softmax probabilities (the module's
# `attention_scores` attribute). Tiled over query rows so blocks fit v7x VMEM.
# Q is already pre-scaled by 1/sqrt(d_k).
# ---------------------------------------------------------------------------
def _probs_kernel(q_ref, k_ref, p_ref):
    s = lax.dot_general(
        q_ref[...], k_ref[...], (((1,), (1,)), ((), ())),
        preferred_element_type=jnp.float32)
    m = jnp.max(s, axis=-1, keepdims=True)
    p = jnp.exp(s - m)
    p_ref[...] = (p * pl.reciprocal(jnp.sum(p, axis=-1, keepdims=True),
                                    approx=True)).astype(p_ref.dtype)


def attention_probs(q_arr, k_arr, col_base, B, S, H, d_k, *, tq_pref=256):
    qb, kb = col_base
    tq = _pick_tile(S, tq_pref, 128)
    nq = S // tq
    return pl.pallas_call(
        _probs_kernel,
        out_shape=jax.ShapeDtypeStruct((B, H, S, S), jnp.float32),
        grid_spec=pltpu.PrefetchScalarGridSpec(
            num_scalar_prefetch=0,
            grid=(B * H, nq),
            in_specs=[
                pl.BlockSpec((tq, d_k),
                             lambda bh, qi: ((bh // H) * nq + qi, qb + bh % H)),
                pl.BlockSpec((S, d_k),
                             lambda bh, qi: (bh // H, kb + bh % H)),
            ],
            out_specs=pl.BlockSpec(
                (pl.Squeezed(), pl.Squeezed(), tq, S),
                lambda bh, qi: (bh // H, bh % H, qi, 0)),
        ),
        compiler_params=pltpu.CompilerParams(
            dimension_semantics=("parallel", "parallel"),
            vmem_limit_bytes=_vmem_limit_bytes(),
        ),
    )(q_arr, k_arr)


# ---------------------------------------------------------------------------
# One-time parameter preparation (hoisted out of the per-forward path):
#   * weights -> bf16 (streamed as bf16 from HBM, no in-kernel casts)
#   * 1/sqrt(d_k) folded into w_q / b_q
#   * fused QKV weights/bias precomputed for the self-attention fast path
# ---------------------------------------------------------------------------
def prepare_params(params, d_model, num_heads):
    d_k = d_model // num_heads
    scale = 1.0 / math.sqrt(d_k)
    w_q = (params["w_q"] * scale).astype(jnp.bfloat16)
    b_q = (params["b_q"] * scale).astype(jnp.float32)
    w_k = params["w_k"].astype(jnp.bfloat16)
    b_k = params["b_k"].astype(jnp.float32)
    w_v = params["w_v"].astype(jnp.bfloat16)
    b_v = params["b_v"].astype(jnp.float32)
    return {
        "w_q": w_q, "b_q": b_q,
        "w_k": w_k, "b_k": b_k,
        "w_v": w_v, "b_v": b_v,
        "w_qkv": jnp.concatenate([w_q, w_k, w_v], axis=0),
        "b_qkv": jnp.concatenate([b_q, b_k, b_v], axis=0),
        "w_o": params["w_o"].astype(jnp.bfloat16),
        "b_o": params["b_o"].astype(jnp.float32),
    }


# ---------------------------------------------------------------------------
# Full module forward
# ---------------------------------------------------------------------------
def multi_head_attention(q, k, v, mask, prepared, num_heads, *,
                         return_attention_scores=False):
    B, S, D = q.shape
    H = num_heads
    d_k = D // H
    del mask  # accepted, intentionally ignored (see faithfulness note at top)

    # Self-attention fast path triggers on object identity (q is k is v).
    if (q is k) and (k is v):
        qkv = linear(q.reshape(B * S, D), prepared["w_qkv"], prepared["b_qkv"],
                     out_dtype=jnp.bfloat16)               # (B*S, 3D) bf16
        q_arr = k_arr = v_arr = qkv
        col_base = (0, H, 2 * H)
    else:
        q_arr = linear(q.reshape(B * S, D), prepared["w_q"], prepared["b_q"],
                       out_dtype=jnp.bfloat16)
        k_arr = linear(k.reshape(B * S, D), prepared["w_k"], prepared["b_k"],
                       out_dtype=jnp.bfloat16)
        v_arr = linear(v.reshape(B * S, D), prepared["w_v"], prepared["b_v"],
                       out_dtype=jnp.bfloat16)
        col_base = (0, 0, 0)

    # (B*S, H*d_k) bf16 context, already in the (batch, seq, heads-merged) layout
    # the output projection wants -> no wrapper-side transposes touch HBM.
    ctx = flash_attention(q_arr, k_arr, v_arr, col_base, B, S, H, d_k,
                          jnp.bfloat16)
    out = linear(ctx, prepared["w_o"], prepared["b_o"],
                 out_dtype=q.dtype).reshape(B, S, D)

    if return_attention_scores:
        probs = attention_probs(q_arr, k_arr, (col_base[0], col_base[1]),
                                B, S, H, d_k)
        return out, probs
    return out


def init_params(key, d_model):
    ks = jax.random.split(key, 8)
    bound = 1.0 / math.sqrt(d_model)

    def u(kk, shape):
        return jax.random.uniform(kk, shape, jnp.float32, -bound, bound)

    return {
        "w_q": u(ks[0], (d_model, d_model)), "b_q": u(ks[1], (d_model,)),
        "w_k": u(ks[2], (d_model, d_model)), "b_k": u(ks[3], (d_model,)),
        "w_v": u(ks[4], (d_model, d_model)), "b_v": u(ks[5], (d_model,)),
        "w_o": u(ks[6], (d_model, d_model)), "b_o": u(ks[7], (d_model,)),
    }


# Pure-JAX f32 reference (same math as the PyTorch module in eval mode).
def reference(q, k, v, params, num_heads):
    B, S, D = q.shape
    d_k = D // num_heads

    def lin(x, w, b):
        return x @ w.T + b

    def split(x):
        return x.reshape(B, S, num_heads, d_k).transpose(0, 2, 1, 3)

    Q = split(lin(q, params["w_q"], params["b_q"]))
    K = split(lin(k, params["w_k"], params["b_k"]))
    V = split(lin(v, params["w_v"], params["b_v"]))
    scores = jnp.einsum("bhqd,bhkd->bhqk", Q, K) / math.sqrt(d_k)
    probs = jax.nn.softmax(scores, axis=-1)
    ctx = jnp.einsum("bhqk,bhkd->bhqd", probs, V)
    x = ctx.transpose(0, 2, 1, 3).reshape(B, S, D)
    return lin(x, params["w_o"], params["b_o"]), probs


if __name__ == "__main__":
    batch, seq, d_model, num_heads = 2, 16, 256, 2  # d_k = 128 (lane-aligned)

    key = jax.random.PRNGKey(0)
    kq, kk, kv, kp = jax.random.split(key, 4)
    q = jax.random.normal(kq, (batch, seq, d_model), jnp.float32)
    k = jax.random.normal(kk, (batch, seq, d_model), jnp.float32)
    v = jax.random.normal(kv, (batch, seq, d_model), jnp.float32)
    mask = jnp.ones((batch, 1, seq, seq), jnp.float32)  # accepted, ignored (see note)
    params = init_params(kp, d_model)
    prepared = prepare_params(params, d_model, num_heads)  # one-time prep, hoisted

    # Cross-attention path (distinct q/k/v => three projections).
    out, probs = multi_head_attention(q, k, v, mask, prepared, num_heads,
                                      return_attention_scores=True)
    out = jax.block_until_ready(out)
    probs = jax.block_until_ready(probs)
    ref_out, ref_probs = reference(q, k, v, params, num_heads)
    assert out.shape == (batch, seq, d_model)
    assert probs.shape == (batch, num_heads, seq, seq)
    # bf16 intermediates/MXU inputs + approx reciprocal => loosened tolerance vs f32.
    assert jnp.allclose(out, ref_out, atol=5e-2, rtol=5e-2)
    assert jnp.allclose(probs, ref_probs, atol=2e-2, rtol=2e-2)

    # Self-attention path (q is k is v => fused QKV projection).
    out_sa = multi_head_attention(q, q, q, mask, prepared, num_heads)
    out_sa = jax.block_until_ready(out_sa)
    ref_sa, _ = reference(q, q, q, params, num_heads)
    assert jnp.allclose(out_sa, ref_sa, atol=5e-2, rtol=5e-2)

    print("KERNEL_OK")
</pallas_src>

<mosaic_0001>
module attributes {stable_mosaic.version = 11 : i64} {
  func.func @_linear_kernel(%arg0: i32, %arg1: i32, %arg2: i32, %arg3: memref<32x256xf32, #tpu.memory_space<vmem>>, %arg4: memref<256x256xbf16, #tpu.memory_space<vmem>>, %arg5: memref<1x256xf32, #tpu.memory_space<vmem>>, %arg6: memref<32x256xbf16, #tpu.memory_space<vmem>>, %arg7: memref<32x256xf32, #tpu.memory_space<vmem>>) attributes {dimension_semantics = [#tpu.dimension_semantics<parallel>, #tpu.dimension_semantics<parallel>, #tpu.dimension_semantics<arbitrary>], iteration_bounds = array<i64: 1, 1, 1>, scalar_prefetch = 0 : i64, scratch_operands = 1 : i64, tpu.core_type = #tpu.core_type<tc>, window_params = [{transform_indices = @transform_0, window_bounds = array<i64: 32, 256>}, {transform_indices = @transform_1, window_bounds = array<i64: 256, 256>}, {transform_indices = @transform_2, window_bounds = array<i64: 1, 256>}, {transform_indices = @transform_3, window_bounds = array<i64: 32, 256>}]} {
    %c0_i32 = arith.constant 0 : i32
    %0 = arith.cmpi eq, %arg2, %c0_i32 : i32
    %1 = arith.extui %0 : i1 to i32
    %c0_i32_0 = arith.constant 0 : i32
    %2 = arith.cmpi ne, %1, %c0_i32_0 : i32
    scf.if %2 {
      %cst_10 = arith.constant 0.000000e+00 : f32
      %13 = vector.broadcast %cst_10 : f32 to vector<32x256xf32>
      %c0_11 = arith.constant 0 : index
      %c0_12 = arith.constant 0 : index
      %14 = vector.load %arg7[%c0_11, %c0_12] : memref<32x256xf32, #tpu.memory_space<vmem>>, vector<32x256xf32>
      tpu.vector_store %arg7[%c0_11, %c0_12], %13 {strides = array<i32>} : memref<32x256xf32, #tpu.memory_space<vmem>>, vector<32x256xf32>,
    } else {
    }
    %c0 = arith.constant 0 : index
    %c0_1 = arith.constant 0 : index
    %3 = vector.load %arg3[%c0, %c0_1] : memref<32x256xf32, #tpu.memory_space<vmem>>, vector<32x256xf32>
    %4 = arith.truncf %3 : vector<32x256xf32> to vector<32x256xbf16>
    %c0_2 = arith.constant 0 : index
    %c0_3 = arith.constant 0 : index
    %5 = vector.load %arg4[%c0_2, %c0_3] : memref<256x256xbf16, #tpu.memory_space<vmem>>, vector<256x256xbf16>
    %c0_4 = arith.constant 0 : index
    %c0_5 = arith.constant 0 : index
    %6 = vector.load %arg7[%c0_4, %c0_5] : memref<32x256xf32, #tpu.memory_space<vmem>>, vector<32x256xf32>
    %cst = arith.constant dense<0.000000e+00> : vector<32x256xf32>
    %7 = tpu.matmul %4, %5, %cst {dimension_numbers = #tpu.dot_dimension_numbers<[1], [1], [0], [0], [0, 0, 1, 0], [], []>} : vector<32x256xbf16>, vector<256x256xbf16>, vector<32x256xf32> -> vector<32x256xf32>
    %8 = arith.addf %6, %7 : vector<32x256xf32>
    %c0_6 = arith.constant 0 : index
    %c0_7 = arith.constant 0 : index
    %9 = vector.load %arg7[%c0_6, %c0_7] : memref<32x256xf32, #tpu.memory_space<vmem>>, vector<32x256xf32>
    tpu.vector_store %arg7[%c0_6, %c0_7], %8 {strides = array<i32>} : memref<32x256xf32, #tpu.memory_space<vmem>>, vector<32x256xf32>,
    %c0_i32_8 = arith.constant 0 : i32
    %10 = arith.cmpi eq, %arg2, %c0_i32_8 : i32
    %11 = arith.extui %10 : i1 to i32
    %c0_i32_9 = arith.constant 0 : i32
    %12 = arith.cmpi ne, %11, %c0_i32_9 : i32
    scf.if %12 {
      %c0_10 = arith.constant 0 : index
      %c0_11 = arith.constant 0 : index
      %13 = vector.load %arg7[%c0_10, %c0_11] : memref<32x256xf32, #tpu.memory_space<vmem>>, vector<32x256xf32>
      %c0_12 = arith.constant 0 : index
      %c0_13 = arith.constant 0 : index
      %14 = vector.load %arg5[%c0_12, %c0_13] : memref<1x256xf32, #tpu.memory_space<vmem>>, vector<1x256xf32>
      %15 = vector.broadcast %14 : vector<1x256xf32> to vector<32x256xf32>
      %16 = arith.addf %13, %15 : vector<32x256xf32>
      %17 = arith.truncf %16 : vector<32x256xf32> to vector<32x256xbf16>
      %c0_14 = arith.constant 0 : index
      %c0_15 = arith.constant 0 : index
      %18 = vector.load %arg6[%c0_14, %c0_15] : memref<32x256xbf16, #tpu.memory_space<vmem>>, vector<32x256xbf16>
      tpu.vector_store %arg6[%c0_14, %c0_15], %17 {strides = array<i32>} : memref<32x256xbf16, #tpu.memory_space<vmem>>, vector<32x256xbf16>,
    } else {
    }
    return
  }
  func.func @transform_0(%arg0: i32, %arg1: i32, %arg2: i32) -> (i32, i32) {
    %c0_i32 = arith.constant 0 : i32
    return %arg0, %arg2 : i32, i32
  }
  func.func @transform_1(%arg0: i32, %arg1: i32, %arg2: i32) -> (i32, i32) {
    %c0_i32 = arith.constant 0 : i32
    return %arg1, %arg2 : i32, i32
  }
  func.func @transform_2(%arg0: i32, %arg1: i32, %arg2: i32) -> (i32, i32) {
    %c0_i32 = arith.constant 0 : i32
    %c0_i32_0 = arith.constant 0 : i32
    return %c0_i32, %arg1 : i32, i32
  }
  func.func @transform_3(%arg0: i32, %arg1: i32, %arg2: i32) -> (i32, i32) {
    %c0_i32 = arith.constant 0 : i32
    return %arg0, %arg1 : i32, i32
  }
}

</mosaic_0001>

<llo_original>
// kernel: tpu_custom_call.1
$region0: #{tpu_custom_call.1}
  #allocation0 [shape = 'u32[]', space=smem, size = 0x4, offset = 0x4, fixed_abs, tag = 'smem constant byte address 0x4 - core index']
  #allocation1 [shape = 'u32[144,128]{1,0:T(1,128)}', space=vmem, size = 0x12000, scoped, tag = 'internal scratch']
  #allocation2 [shape = 'f32[32,256]{1,0:T(8,128)}', space=vmem, size = 0x8000, scoped, tag = 'scratch operand']
  %s0 = inlined_call_operand.hbm [shape: f32[32,256], index: 0, kind: input, shape index: {}]
  %s1 = inlined_call_operand.hbm [shape: bf16[256,256], index: 1, kind: input, shape index: {}]
  %s2 = inlined_call_operand.vmem [shape: f32[1,256], index: 2, kind: input, shape index: {}]
  %s3 = inlined_call_operand.hbm [shape: bf16[32,256], index: 3, kind: output, shape index: {}]
  %s4 = sld [smem:[#allocation0]]
  $region38: #{tpu_custom_call.1} parent=0
    _
  %s6 = ssub.s32 1, %s4
  %s7 = scalar_select 0, %s6, %s4
  $region1: #{tpu_custom_call.1} parent=0
    #allocation3 [shape = 'u8[32768]{0}', space=vmem, size = 0x8000, scoped, tag = 'input window, operand 0, single buffered']
    #allocation4 [shape = 's32[1]{0}', space=sflag, size = 0x4, scoped, tag = 'scoped memory for tpu_custom_call.1']
    #allocation5 [shape = 's32[1]{0}', space=sflag, size = 0x4, scoped, tag = 'scoped memory for tpu_custom_call.1']
    #allocation6 [shape = 'u8[131072]{0}', space=vmem, size = 0x20000, scoped, tag = 'input window, operand 1, single buffered']
    #allocation7 [shape = 's32[1]{0}', space=sflag, size = 0x4, scoped, tag = 'scoped memory for tpu_custom_call.1']
    #allocation8 [shape = 'u8[16384]{0}', space=vmem, size = 0x4000, scoped, tag = 'output window, operand 0, single buffered']
    %8 = vsyncpa [#allocation4], 0
    %9 = vsyncpa [#allocation7], 0
    %10 = vsyncpa [#allocation5], 0
    // Predicated region
    $region2: #{tpu_custom_call.1} parent=1 // pred_check
      _
    $region3: #{tpu_custom_call.1} parent=1 // pred_check_branch
      %12 = sbr.rel (0) target = $region5
    $region4: #{tpu_custom_call.1} parent=1 // pred_region
      %s14 = ssub.s32 1024, 1024
      %15 = vsyncadd [#allocation4], %s14
      %s16 = sshll.u32 [#allocation3], 4
      %s17 = int_to_ptr.vmem [resolvable:$true] %s16
      %22 = dma.hbm_to_vmem [thread:$0]  %s0, 1024, %s17, [#allocation4], 256, 256, 16
    $region5: #{tpu_custom_call.1} parent=1 // pred_fallthru
      _
    // Predicated region
    $region6: #{tpu_custom_call.1} parent=1 // pred_check
      _
    $region7: #{tpu_custom_call.1} parent=1 // pred_check_branch
      %24 = sbr.rel (0) target = $region9
    $region8: #{tpu_custom_call.1} parent=1 // pred_region
      %s26 = ssub.s32 4096, 4096
      %27 = vsyncadd [#allocation7], %s26
      %s28 = sshll.u32 [#allocation6], 4
      %s29 = int_to_ptr.vmem [resolvable:$true] %s28
      %34 = dma.hbm_to_vmem [thread:$0]  %s1, 4096, %s29, [#allocation7], 128, 128, 8
    $region9: #{tpu_custom_call.1} parent=1 // pred_fallthru
      _
    // Predicated region
    $region10: #{tpu_custom_call.1} parent=1 // pred_check
      _
    $region11: #{tpu_custom_call.1} parent=1 // pred_check_branch
      %36 = sbr.rel (0) target = $region13
    $region12: #{tpu_custom_call.1} parent=1 // pred_region
      _
    $region13: #{tpu_custom_call.1} parent=1 // pred_fallthru
      _
    // Predicated region
    $region14: #{tpu_custom_call.1} parent=1 // pred_check
      _
    $region15: #{tpu_custom_call.1} parent=1 // pred_check_branch
      %38 = sbr.rel (0) target = $region17
    $region16: #{tpu_custom_call.1} parent=1 // pred_region
      %39 = dma.done [#allocation4], 1024
    $region17: #{tpu_custom_call.1} parent=1 // pred_fallthru
      _
    // Predicated region
    $region18: #{tpu_custom_call.1} parent=1 // pred_check
      _
    $region19: #{tpu_custom_call.1} parent=1 // pred_check_branch
      %41 = sbr.rel (0) target = $region21
    $region20: #{tpu_custom_call.1} parent=1 // pred_region
      %42 = dma.done [#allocation7], 4096
    $region21: #{tpu_custom_call.1} parent=1 // pred_fallthru
      _
    %p43 = scmp.eq.s32.totalorder 0, 0
    // Predicated region
    $region22: #{tpu_custom_call.1} parent=1 // pred_check
      %p44 = pneg %p43
    $region23: #{tpu_custom_call.1} parent=1 // pred_check_branch
      %46 = sbr.rel (%p44) target = $region25
    $region24: #{tpu_custom_call.1} parent=1 // pred_region
      %47 = vst [vmem:[#allocation2] sm:$0xff] 0.0
      %48 = vst [vmem:[#allocation2 + $0x8] sm:$0xff] 0.0
      %49 = vst [vmem:[#allocation2 + $0x10] sm:$0xff] 0.0
      %50 = vst [vmem:[#allocation2 + $0x18] sm:$0xff] 0.0
      %51 = vst [vmem:[#allocation2 + $0x20] sm:$0xff] 0.0
      %52 = vst [vmem:[#allocation2 + $0x28] sm:$0xff] 0.0
      %53 = vst [vmem:[#allocation2 + $0x30] sm:$0xff] 0.0
      %54 = vst [vmem:[#allocation2 + $0x38] sm:$0xff] 0.0
    $region25: #{tpu_custom_call.1} parent=1 // pred_fallthru
      _
    %v55 = vld [vmem:[#allocation3] sm:$0xff]
    %v56 = vld [vmem:[#allocation3 + $0x8] sm:$0xff]
    %v57 = vld [vmem:[#allocation3 + $0x10] sm:$0xff]
    %v58 = vld [vmem:[#allocation3 + $0x18] sm:$0xff]
    %v59 = vld [vmem:[#allocation3 + $0x20] sm:$0xff]
    %v60 = vld [vmem:[#allocation3 + $0x28] sm:$0xff]
    %v61 = vld [vmem:[#allocation3 + $0x30] sm:$0xff]
    %v62 = vld [vmem:[#allocation3 + $0x38] sm:$0xff]
    %v63 = vpack.c.bf16 %v57, %v55
    %v64 = vpack.c.bf16 %v58, %v56
    %v65 = vpack.c.bf16 %v61, %v59
    %v66 = vpack.c.bf16 %v62, %v60
    %v67 = vld [vmem:[#allocation6] sm:$0xff]
    %v68 = vld [vmem:[#allocation6 + $0x8] sm:$0xff]
    %v69 = vld [vmem:[#allocation6 + $0x10] sm:$0xff]
    %v70 = vld [vmem:[#allocation6 + $0x18] sm:$0xff]
    %v71 = vld [vmem:[#allocation6 + $0x20] sm:$0xff]
    %v72 = vld [vmem:[#allocation6 + $0x28] sm:$0xff]
    %v73 = vld [vmem:[#allocation6 + $0x30] sm:$0xff]
    %v74 = vld [vmem:[#allocation6 + $0x38] sm:$0xff]
    %v75 = vld [vmem:[#allocation6 + $0x40] sm:$0xff]
    %v76 = vld [vmem:[#allocation6 + $0x48] sm:$0xff]
    %v77 = vld [vmem:[#allocation6 + $0x50] sm:$0xff]
    %v78 = vld [vmem:[#allocation6 + $0x58] sm:$0xff]
    %v79 = vld [vmem:[#allocation6 + $0x60] sm:$0xff]
    %v80 = vld [vmem:[#allocation6 + $0x68] sm:$0xff]
    %v81 = vld [vmem:[#allocation6 + $0x70] sm:$0xff]
    %v82 = vld [vmem:[#allocation6 + $0x78] sm:$0xff]
    %v83 = vld [vmem:[#allocation6 + $0x80] sm:$0xff]
    %v84 = vld [vmem:[#allocation6 + $0x88] sm:$0xff]
    %v85 = vld [vmem:[#allocation6 + $0x90] sm:$0xff]
    %v86 = vld [vmem:[#allocation6 + $0x98] sm:$0xff]
    %v87 = vld [vmem:[#allocation6 + $0xa0] sm:$0xff]
    %v88 = vld [vmem:[#allocation6 + $0xa8] sm:$0xff]
    %v89 = vld [vmem:[#allocation6 + $0xb0] sm:$0xff]
    %v90 = vld [vmem:[#allocation6 + $0xb8] sm:$0xff]
    %v91 = vld [vmem:[#allocation6 + $0xc0] sm:$0xff]
    %v92 = vld [vmem:[#allocation6 + $0xc8] sm:$0xff]
    %v93 = vld [vmem:[#allocation6 + $0xd0] sm:$0xff]
    %v94 = vld [vmem:[#allocation6 + $0xd8] sm:$0xff]
    %v95 = vld [vmem:[#allocation6 + $0xe0] sm:$0xff]
    %v96 = vld [vmem:[#allocation6 + $0xe8] sm:$0xff]
    %v97 = vld [vmem:[#allocation6 + $0xf0] sm:$0xff]
    %v98 = vld [vmem:[#allocation6 + $0xf8] sm:$0xff]
    %v99 = vld [vmem:[#allocation2] sm:$0xff]
    %v100 = vld [vmem:[#allocation2 + $0x8] sm:$0xff]
    %v101 = vld [vmem:[#allocation2 + $0x10] sm:$0xff]
    %v102 = vld [vmem:[#allocation2 + $0x18] sm:$0xff]
    %v103 = vld [vmem:[#allocation2 + $0x20] sm:$0xff]
    %v104 = vld [vmem:[#allocation2 + $0x28] sm:$0xff]
    %v105 = vld [vmem:[#allocation2 + $0x30] sm:$0xff]
    %v106 = vld [vmem:[#allocation2 + $0x38] sm:$0xff]
    %v139 = vunpack.c.l.b16 %v67
    %v140 = vunpack.c.h.b16 %v67
    %v141 = vunpack.c.l.b16 %v68
    %v142 = vunpack.c.h.b16 %v68
    %v143 = vunpack.c.l.b16 %v69
    %v144 = vunpack.c.h.b16 %v69
    %v145 = vunpack.c.l.b16 %v70
    %v146 = vunpack.c.h.b16 %v70
    %v147 = vunpack.c.l.b16 %v71
    %v148 = vunpack.c.h.b16 %v71
    %v149 = vunpack.c.l.b16 %v72
    %v150 = vunpack.c.h.b16 %v72
    %v151 = vunpack.c.l.b16 %v73
    %v152 = vunpack.c.h.b16 %v73
    %v153 = vunpack.c.l.b16 %v74
    %v154 = vunpack.c.h.b16 %v74
    %v155 = vunpack.c.l.b16 %v75
    %v156 = vunpack.c.h.b16 %v75
    %v157 = vunpack.c.l.b16 %v76
    %v158 = vunpack.c.h.b16 %v76
    %v159 = vunpack.c.l.b16 %v77
    %v160 = vunpack.c.h.b16 %v77
    %v161 = vunpack.c.l.b16 %v78
    %v162 = vunpack.c.h.b16 %v78
    %v163 = vunpack.c.l.b16 %v79
    %v164 = vunpack.c.h.b16 %v79
    %v165 = vunpack.c.l.b16 %v80
    %v166 = vunpack.c.h.b16 %v80
    %v167 = vunpack.c.l.b16 %v81
    %v168 = vunpack.c.h.b16 %v81
    %v169 = vunpack.c.l.b16 %v82
    %v170 = vunpack.c.h.b16 %v82
    %v171 = vunpack.c.l.b16 %v83
    %v172 = vunpack.c.h.b16 %v83
    %v173 = vunpack.c.l.b16 %v84
    %v174 = vunpack.c.h.b16 %v84
    %v175 = vunpack.c.l.b16 %v85
    %v176 = vunpack.c.h.b16 %v85
    %v177 = vunpack.c.l.b16 %v86
    %v178 = vunpack.c.h.b16 %v86
    %v179 = vunpack.c.l.b16 %v87
    %v180 = vunpack.c.h.b16 %v87
    %v181 = vunpack.c.l.b16 %v88
    %v182 = vunpack.c.h.b16 %v88
    %v183 = vunpack.c.l.b16 %v89
    %v184 = vunpack.c.h.b16 %v89
    %v185 = vunpack.c.l.b16 %v90
    %v186 = vunpack.c.h.b16 %v90
    %v187 = vunpack.c.l.b16 %v91
    %v188 = vunpack.c.h.b16 %v91
    %v189 = vunpack.c.l.b16 %v92
    %v190 = vunpack.c.h.b16 %v92
    %v191 = vunpack.c.l.b16 %v93
    %v192 = vunpack.c.h.b16 %v93
    %v193 = vunpack.c.l.b16 %v94
    %v194 = vunpack.c.h.b16 %v94
    %v195 = vunpack.c.l.b16 %v95
    %v196 = vunpack.c.h.b16 %v95
    %v197 = vunpack.c.l.b16 %v96
    %v198 = vunpack.c.h.b16 %v96
    %v199 = vunpack.c.l.b16 %v97
    %v200 = vunpack.c.h.b16 %v97
    %v201 = vunpack.c.l.b16 %v98
    %v202 = vunpack.c.h.b16 %v98
    %v203 = vpack.c.b16 %v141, %v139
    %v204 = vpack.c.b16 %v142, %v140
    %v205 = vpack.c.b16 %v145, %v143
    %v206 = vpack.c.b16 %v146, %v144
    %v207 = vpack.c.b16 %v149, %v147
    %v208 = vpack.c.b16 %v150, %v148
    %v209 = vpack.c.b16 %v153, %v151
    %v210 = vpack.c.b16 %v154, %v152
    %v211 = vpack.c.b16 %v157, %v155
    %v212 = vpack.c.b16 %v158, %v156
    %v213 = vpack.c.b16 %v161, %v159
    %v214 = vpack.c.b16 %v162, %v160
    %v215 = vpack.c.b16 %v165, %v163
    %v216 = vpack.c.b16 %v166, %v164
    %v217 = vpack.c.b16 %v169, %v167
    %v218 = vpack.c.b16 %v170, %v168
    %v219 = vpack.c.b16 %v173, %v171
    %v220 = vpack.c.b16 %v174, %v172
    %v221 = vpack.c.b16 %v177, %v175
    %v222 = vpack.c.b16 %v178, %v176
    %v223 = vpack.c.b16 %v181, %v179
    %v224 = vpack.c.b16 %v182, %v180
    %v225 = vpack.c.b16 %v185, %v183
    %v226 = vpack.c.b16 %v186, %v184
    %v227 = vpack.c.b16 %v189, %v187
    %v228 = vpack.c.b16 %v190, %v188
    %v229 = vpack.c.b16 %v193, %v191
    %v230 = vpack.c.b16 %v194, %v192
    %v231 = vpack.c.b16 %v197, %v195
    %v232 = vpack.c.b16 %v198, %v196
    %v233 = vpack.c.b16 %v201, %v199
    %v234 = vpack.c.b16 %v202, %v200
    %267 = vmatprep.subr.bf16.mxu0 %v204
    %268 = vmatpush1.bf16.xpose.msra.mxu0 %v203
    %269 = vmatprep.subr.bf16.mxu0 %v206
    %270 = vmatpush1.bf16.xpose.msra.mxu0 %v205
    %271 = vmatprep.subr.bf16.mxu0 %v208
    %272 = vmatpush1.bf16.xpose.msra.mxu0 %v207
    %273 = vmatprep.subr.bf16.mxu0 %v210
    %274 = vmatpush1.bf16.xpose.msra.mxu0 %v209
    %275 = vmatprep.subr.bf16.mxu0 %v212
    %276 = vmatpush1.bf16.xpose.msra.mxu0 %v211
    %277 = vmatprep.subr.bf16.mxu0 %v214
    %278 = vmatpush1.bf16.xpose.msra.mxu0 %v213
    %279 = vmatprep.subr.bf16.mxu0 %v216
    %280 = vmatpush1.bf16.xpose.msra.mxu0 %v215
    %281 = vmatprep.subr.bf16.mxu0 %v218
    %282 = vmatpush1.bf16.xpose.msra.mxu0 %v217
    %283 = vmatprep.subr.bf16.mxu0 %v220
    %284 = vmatpush1.bf16.xpose.msra.mxu0 %v219
    %285 = vmatprep.subr.bf16.mxu0 %v222
    %286 = vmatpush1.bf16.xpose.msra.mxu0 %v221
    %287 = vmatprep.subr.bf16.mxu0 %v224
    %288 = vmatpush1.bf16.xpose.msra.mxu0 %v223
    %289 = vmatprep.subr.bf16.mxu0 %v226
    %290 = vmatpush1.bf16.xpose.msra.mxu0 %v225
    %291 = vmatprep.subr.bf16.mxu0 %v228
    %292 = vmatpush1.bf16.xpose.msra.mxu0 %v227
    %293 = vmatprep.subr.bf16.mxu0 %v230
    %294 = vmatpush1.bf16.xpose.msra.mxu0 %v229
    %295 = vmatprep.subr.bf16.mxu0 %v232
    %296 = vmatpush1.bf16.xpose.msra.mxu0 %v231
    %297 = vmatprep.subr.bf16.mxu0 %v234
    %298 = vmatpush1.bf16.xpose.msra.mxu0 %v233
    %299 = vmatprep.mubr.bf16.mxu0 %v64
    %300 = vmatmul.mubr.bf16.gmra.mrb[0].mxu0 %v63
    %v301 = vpop.f32.mrb[0].mxu0
    %v302 = vadd.f32 0.0, %v301
    %v303 = vpop.f32.mrb[0].mxu0
    %v304 = vadd.f32 0.0, %v303
    %v305 = vpop.f32.mrb[0].mxu0
    %v306 = vadd.f32 0.0, %v305
    %v307 = vpop.f32.mrb[0].mxu0
    %v308 = vadd.f32 0.0, %v307
    %309 = vmatprep.mubr.bf16.mxu0 %v66
    %310 = vmatmul.mubr.bf16.gmra.mrb[0].mxu0 %v65
    %v311 = vpop.f32.mrb[0].mxu0
    %v312 = vadd.f32 0.0, %v311
    %v313 = vpop.f32.mrb[0].mxu0
    %v314 = vadd.f32 0.0, %v313
    %v315 = vpop.f32.mrb[0].mxu0
    %v316 = vadd.f32 0.0, %v315
    %v317 = vpop.f32.mrb[0].mxu0
    %v318 = vadd.f32 0.0, %v317
    %319 = vdwg.mxu0
    %v320 = vadd.f32 %v99, %v302
    %v321 = vadd.f32 %v100, %v304
    %v322 = vadd.f32 %v101, %v306
    %v323 = vadd.f32 %v102, %v308
    %v324 = vadd.f32 %v103, %v312
    %v325 = vadd.f32 %v104, %v314
    %v326 = vadd.f32 %v105, %v316
    %v327 = vadd.f32 %v106, %v318
    %328 = vst [vmem:[#allocation2] sm:$0xff] %v320
    %329 = vst [vmem:[#allocation2 + $0x8] sm:$0xff] %v321
    %330 = vst [vmem:[#allocation2 + $0x10] sm:$0xff] %v322
    %331 = vst [vmem:[#allocation2 + $0x18] sm:$0xff] %v323
    %332 = vst [vmem:[#allocation2 + $0x20] sm:$0xff] %v324
    %333 = vst [vmem:[#allocation2 + $0x28] sm:$0xff] %v325
    %334 = vst [vmem:[#allocation2 + $0x30] sm:$0xff] %v326
    %335 = vst [vmem:[#allocation2 + $0x38] sm:$0xff] %v327
    // Predicated region
    $region26: #{tpu_custom_call.1} parent=1 // pred_check
      %p336 = pneg %p43
    $region27: #{tpu_custom_call.1} parent=1 // pred_check_branch
      %338 = sbr.rel (%p336) target = $region29
    $region28: #{tpu_custom_call.1} parent=1 // pred_region
      %v339 = vld [vmem:[#allocation2] sm:$0xff]
      %v340 = vld [vmem:[#allocation2 + $0x8] sm:$0xff]
      %v341 = vld [vmem:[#allocation2 + $0x10] sm:$0xff]
      %v342 = vld [vmem:[#allocation2 + $0x18] sm:$0xff]
      %v343 = vld [vmem:[#allocation2 + $0x20] sm:$0xff]
      %v344 = vld [vmem:[#allocation2 + $0x28] sm:$0xff]
      %v345 = vld [vmem:[#allocation2 + $0x30] sm:$0xff]
      %v346 = vld [vmem:[#allocation2 + $0x38] sm:$0xff]
      %v347 = vld [vmem:[%s2] sm:$0x3]
      %v349 = vlaneseq
      %v350 = vshrl.u32 %v349, 7
      %v351 = vsub.s32 0, %v350
      %v352 = vrot.slane %v347, %v351
      %v353 = vlaneseq
      %v354 = vshrl.u32 %v353, 7
      %v355 = vsub.s32 1, %v354
      %v356 = vrot.slane %v347, %v355
      %v359 = vadd.f32 %v339, %v352
      %v360 = vadd.f32 %v340, %v356
      %v361 = vadd.f32 %v341, %v352
      %v362 = vadd.f32 %v342, %v356
      %v363 = vadd.f32 %v343, %v352
      %v364 = vadd.f32 %v344, %v356
      %v365 = vadd.f32 %v345, %v352
      %v366 = vadd.f32 %v346, %v356
      %v367 = vpack.c.bf16 %v361, %v359
      %v368 = vpack.c.bf16 %v362, %v360
      %v369 = vpack.c.bf16 %v365, %v363
      %v370 = vpack.c.bf16 %v366, %v364
      %v375 = vunpack.c.l.b16 %v367
      %v376 = vunpack.c.l.b16 %v368
      %v377 = vunpack.c.h.b16 %v367
      %v378 = vunpack.c.h.b16 %v368
      %v379 = vunpack.c.l.b16 %v369
      %v380 = vunpack.c.l.b16 %v370
      %v381 = vunpack.c.h.b16 %v369
      %v382 = vunpack.c.h.b16 %v370
      %v383 = vpack.c.b16 %v376, %v375
      %v384 = vpack.c.b16 %v378, %v377
      %v385 = vpack.c.b16 %v380, %v379
      %v386 = vpack.c.b16 %v382, %v381
      %391 = vst [vmem:[#allocation8] sm:$0xff] %v383
      %392 = vst [vmem:[#allocation8 + $0x8] sm:$0xff] %v384
      %393 = vst [vmem:[#allocation8 + $0x10] sm:$0xff] %v385
      %394 = vst [vmem:[#allocation8 + $0x18] sm:$0xff] %v386
    $region29: #{tpu_custom_call.1} parent=1 // pred_fallthru
      _
    // Predicated region
    $region30: #{tpu_custom_call.1} parent=1 // pred_check
      _
    $region31: #{tpu_custom_call.1} parent=1 // pred_check_branch
      %396 = sbr.rel (0) target = $region33
    $region32: #{tpu_custom_call.1} parent=1 // pred_region
      %s398 = ssub.s32 512, 512
      %399 = vsyncadd [#allocation5], %s398
      %s400 = sshll.u32 [#allocation8], 4
      %s401 = int_to_ptr.vmem [resolvable:$true] %s400
      %406 = dma.vmem_to_hbm [thread:$0]  %s401, 512, %s3, [#allocation5], 128, 128, 8
    $region33: #{tpu_custom_call.1} parent=1 // pred_fallthru
      _
    // Predicated region
    $region34: #{tpu_custom_call.1} parent=1 // pred_check
      _
    $region35: #{tpu_custom_call.1} parent=1 // pred_check_branch
      %408 = sbr.rel (0) target = $region37
    $region36: #{tpu_custom_call.1} parent=1 // pred_region
      %409 = dma.done [#allocation5], 512
    $region37: #{tpu_custom_call.1} parent=1 // pred_fallthru
      _
    %410 = vsyncpa [#allocation4], 1
    %411 = vsyncpa [#allocation7], 1
    %412 = vsyncpa [#allocation5], 1

</llo_original>
